<compile_context>
chip_gen: v7x
topology: tpu7x:2x2x1
jax: 0.10.0
libtpu: 0.0.40
codegen_flags: <defaults>
</compile_context>

<pallas_src>
import jax
import jax.numpy as jnp
from jax.experimental import pallas as pl
from jax.experimental.pallas import tpu as pltpu

LANE = 128


# ----------------------------- parameter glue -------------------------------

def fake_quant_weight_int8_fixed_point(w):
    """Brevitas-style Int8WeightPerTensorFixedPoint: per-tensor power-of-two
    scale from stats (max abs), narrow-range signed int8 [-127, 127],
    quantize-dequantize (fake quant)."""
    max_abs = jnp.maximum(jnp.max(jnp.abs(w)), 1e-8)
    scale = 2.0 ** jnp.ceil(jnp.log2(max_abs / 127.0))
    wq = jnp.clip(jnp.round(w / scale), -127.0, 127.0) * scale
    return wq.astype(jnp.float32)


def linear_init(key, fan_in, fan_out):
    """Deterministic init mimicking torch.nn.Linear default (U[-1/sqrt(fan_in), +])."""
    kw, kb = jax.random.split(key)
    bound = 1.0 / jnp.sqrt(jnp.float32(fan_in))
    # stored already transposed: (fan_in, fan_out) so kernel does x @ W
    w = jax.random.uniform(kw, (fan_in, fan_out), jnp.float32, -bound, bound)
    b = jax.random.uniform(kb, (1, fan_out), jnp.float32, -bound, bound)
    return w, b


def _round_up(n, m):
    return ((n + m - 1) // m) * m


def _pad2d(a, rows, cols):
    return jnp.pad(a, ((0, rows - a.shape[0]), (0, cols - a.shape[1])))


# ------------------------------ shared quant math ----------------------------

def _act_fake_quant_relu(x, scale):
    """QuantReLU(bit_width=8): ReLU then unsigned 8-bit fake quantization.
    Reciprocal is hoisted (scalar) and we multiply; reference uses the exact
    same expression so kernel and reference agree bit-for-bit."""
    inv = 1.0 / scale
    x = jnp.maximum(x, 0.0)
    return jnp.clip(jnp.round(x * inv), 0.0, 255.0) * scale


# ------------------------------ Pallas kernel --------------------------------

def mlp_kernel(x_ref,
               w1_ref, b1_ref,
               w2_ref, b2_ref,
               w3_ref, b3_ref,
               s_ref,            # SMEM: [s1, s2]
               o_ref):
    s1 = s_ref[0]
    s2 = s_ref[1]

    x = x_ref[...]

    # Hidden layer 1: QuantLinear + QuantReLU (dropout is identity in eval)
    h = jnp.dot(x, w1_ref[...], preferred_element_type=jnp.float32) + b1_ref[...]
    h = _act_fake_quant_relu(h, s1)

    # Hidden layer 2
    h = jnp.dot(h, w2_ref[...], preferred_element_type=jnp.float32) + b2_ref[...]
    h = _act_fake_quant_relu(h, s2)

    # Output layer (no quantized activation); lane-dense (padded-to-128) store.
    o_ref[...] = (jnp.dot(h, w3_ref[...], preferred_element_type=jnp.float32)
                  + b3_ref[...])


def quantized_nn_forward(x, params, *, batch_tile=None):
    """params = (w1, b1, s1, w2, b2, s2, w3, b3) with weights already
    fake-quantized (weight quantization is parameter preprocessing, done in
    plain JAX glue). Feature padding to 128 lanes is done here; the padded
    rows/columns are zero so they do not change the real outputs."""
    w1, b1, s1, w2, b2, s2, w3, b3 = params
    B, d_in = x.shape
    units = w1.shape[1]
    out_dim = w3.shape[1]

    d_pad = _round_up(max(d_in, LANE), LANE)
    u_pad = _round_up(max(units, LANE), LANE)
    o_pad = _round_up(max(out_dim, LANE), LANE)

    xp = _pad2d(x, B, d_pad)
    w1p = _pad2d(w1, d_pad, u_pad)
    b1p = _pad2d(b1, 1, u_pad)
    w2p = _pad2d(w2, u_pad, u_pad)
    b2p = _pad2d(b2, 1, u_pad)
    w3p = _pad2d(w3, u_pad, o_pad)
    b3p = _pad2d(b3, 1, o_pad)
    scales = jnp.concatenate(
        [jnp.reshape(s1, (-1,)), jnp.reshape(s2, (-1,))]).astype(jnp.float32)

    # Full-batch tile: the whole (tiny) problem fits in VMEM with huge margin,
    # so collapse the grid to a single step and avoid per-step pipeline cost.
    # (If B grows large, pass batch_tile=256..512 to keep 2+ parallel steps
    # for v7x megacore.)
    if batch_tile is None:
        batch_tile = B
    assert B % batch_tile == 0
    assert batch_tile == B or batch_tile % 8 == 0
    grid = (B // batch_tile,)

    full = lambda i: (0, 0)   # replicated, VMEM-resident (weights / biases)
    rows = lambda i: (i, 0)   # tiled over batch

    out_padded = pl.pallas_call(
        mlp_kernel,
        out_shape=jax.ShapeDtypeStruct((B, o_pad), jnp.float32),
        grid_spec=pltpu.PrefetchScalarGridSpec(
            num_scalar_prefetch=0,
            grid=grid,
            in_specs=[
                pl.BlockSpec((batch_tile, d_pad), rows),                   # x
                pl.BlockSpec((d_pad, u_pad), full),                        # w1
                pl.BlockSpec((1, u_pad), full),                            # b1
                pl.BlockSpec((u_pad, u_pad), full),                        # w2
                pl.BlockSpec((1, u_pad), full),                            # b2
                pl.BlockSpec((u_pad, o_pad), full),                        # w3
                pl.BlockSpec((1, o_pad), full),                            # b3
                pl.BlockSpec(memory_space=pltpu.MemorySpace.SMEM),         # scales
            ],
            out_specs=pl.BlockSpec((batch_tile, o_pad), rows),
        ),
        compiler_params=pltpu.CompilerParams(
            dimension_semantics=("parallel",)),
    )(xp, w1p, b1p, w2p, b2p, w3p, b3p, scales)

    # Slice the real output columns back out (lane-dense write inside kernel).
    return out_padded[:, :out_dim]


# ------------------------------ reference (JAX) -------------------------------

def reference_forward(x, params):
    w1, b1, s1, w2, b2, s2, w3, b3 = params
    h = x @ w1 + b1
    h = _act_fake_quant_relu(h, s1[0, 0])
    h = h @ w2 + b2
    h = _act_fake_quant_relu(h, s2[0, 0])
    return h @ w3 + b3


# ----------------------------------- main -------------------------------------

if __name__ == "__main__":
    input_dim = 32
    units = 64
    batch = 16

    key = jax.random.PRNGKey(0)
    kx, k1, k2, k3 = jax.random.split(key, 4)

    # Deterministic synthetic parameters (shapes from __init__).
    w1_f, b1 = linear_init(k1, input_dim, units)
    w2_f, b2 = linear_init(k2, units, units)
    w3_f, b3 = linear_init(k3, units, 1)

    # Int8 per-tensor fixed-point weight fake-quantization (glue / preprocessing).
    w1 = fake_quant_weight_int8_fixed_point(w1_f)
    w2 = fake_quant_weight_int8_fixed_point(w2_f)
    w3 = fake_quant_weight_int8_fixed_point(w3_f)

    # Deterministic unsigned-8-bit activation scales (stand-in for learned
    # QuantReLU scales; brevitas would learn these from stats).
    s1 = jnp.full((1, 1), 6.0 / 255.0, jnp.float32)
    s2 = jnp.full((1, 1), 6.0 / 255.0, jnp.float32)

    # TODO(synk): nn.Dropout is identity in eval mode; training-mode dropout
    # (with pltpu.prng_random_bits) is not implemented here.

    params = (w1, b1, s1, w2, b2, s2, w3, b3)

    x = jax.random.normal(kx, (batch, input_dim), jnp.float32)

    out = quantized_nn_forward(x, params)
    out = jax.block_until_ready(out)

    ref = reference_forward(x, params)
    assert out.shape == (batch, 1)
    assert jnp.allclose(out, ref, atol=1e-5, rtol=1e-5), (
        f"max abs diff {jnp.max(jnp.abs(out - ref))}")

    print("KERNEL_OK")
</pallas_src>

<mosaic_0001>
module attributes {stable_mosaic.version = 11 : i64} {
  func.func @mlp_kernel(%arg0: i32, %arg1: memref<16x128xf32, #tpu.memory_space<vmem>>, %arg2: memref<128x128xf32, #tpu.memory_space<vmem>>, %arg3: memref<1x128xf32, #tpu.memory_space<vmem>>, %arg4: memref<128x128xf32, #tpu.memory_space<vmem>>, %arg5: memref<1x128xf32, #tpu.memory_space<vmem>>, %arg6: memref<128x128xf32, #tpu.memory_space<vmem>>, %arg7: memref<1x128xf32, #tpu.memory_space<vmem>>, %arg8: memref<2xf32, #tpu.memory_space<smem>>, %arg9: memref<16x128xf32, #tpu.memory_space<vmem>>) attributes {dimension_semantics = [#tpu.dimension_semantics<parallel>], iteration_bounds = array<i64: 1>, scalar_prefetch = 0 : i64, scratch_operands = 0 : i64, tpu.core_type = #tpu.core_type<tc>, window_params = [{transform_indices = @transform_0, window_bounds = array<i64: 16, 128>}, {pipeline_mode = #tpu.pipeline_mode<synchronous>, transform_indices = @transform_1, window_bounds = array<i64: 128, 128>}, {pipeline_mode = #tpu.pipeline_mode<synchronous>, transform_indices = @transform_2, window_bounds = array<i64: 1, 128>}, {pipeline_mode = #tpu.pipeline_mode<synchronous>, transform_indices = @transform_3, window_bounds = array<i64: 128, 128>}, {pipeline_mode = #tpu.pipeline_mode<synchronous>, transform_indices = @transform_4, window_bounds = array<i64: 1, 128>}, {pipeline_mode = #tpu.pipeline_mode<synchronous>, transform_indices = @transform_5, window_bounds = array<i64: 128, 128>}, {pipeline_mode = #tpu.pipeline_mode<synchronous>, transform_indices = @transform_6, window_bounds = array<i64: 1, 128>}, {transform_indices = @transform_7, window_bounds = array<i64: 2>}, {transform_indices = @transform_8, window_bounds = array<i64: 16, 128>}]} {
    %c0 = arith.constant 0 : index
    %0 = memref.load %arg8[%c0] : memref<2xf32, #tpu.memory_space<smem>>
    %c1 = arith.constant 1 : index
    %1 = memref.load %arg8[%c1] : memref<2xf32, #tpu.memory_space<smem>>
    %c0_0 = arith.constant 0 : index
    %c0_1 = arith.constant 0 : index
    %2 = vector.load %arg1[%c0_0, %c0_1] : memref<16x128xf32, #tpu.memory_space<vmem>>, vector<16x128xf32>
    %c0_2 = arith.constant 0 : index
    %c0_3 = arith.constant 0 : index
    %3 = vector.load %arg2[%c0_2, %c0_3] : memref<128x128xf32, #tpu.memory_space<vmem>>, vector<128x128xf32>
    %cst = arith.constant dense<0.000000e+00> : vector<16x128xf32>
    %4 = tpu.matmul %2, %3, %cst {dimension_numbers = #tpu.dot_dimension_numbers<[1], [0], [0], [1], [0, 0, 1, 1], [], []>} : vector<16x128xf32>, vector<128x128xf32>, vector<16x128xf32> -> vector<16x128xf32>
    %c0_4 = arith.constant 0 : index
    %c0_5 = arith.constant 0 : index
    %5 = vector.load %arg3[%c0_4, %c0_5] : memref<1x128xf32, #tpu.memory_space<vmem>>, vector<1x128xf32>
    %6 = vector.broadcast %5 : vector<1x128xf32> to vector<16x128xf32>
    %7 = arith.addf %4, %6 : vector<16x128xf32>
    %cst_6 = arith.constant 1.000000e+00 : f32
    %8 = arith.divf %cst_6, %0 : f32
    %cst_7 = arith.constant 0.000000e+00 : f32
    %9 = vector.broadcast %cst_7 : f32 to vector<16x128xf32>
    %10 = arith.maximumf %7, %9 : vector<16x128xf32>
    %11 = vector.broadcast %8 : f32 to vector<16x128xf32>
    %12 = arith.mulf %10, %11 : vector<16x128xf32>
    %13 = math.roundeven %12 : vector<16x128xf32>
    %cst_8 = arith.constant 0.000000e+00 : f32
    %cst_9 = arith.constant 2.550000e+02 : f32
    %14 = vector.broadcast %cst_8 : f32 to vector<16x128xf32>
    %15 = arith.maximumf %14, %13 : vector<16x128xf32>
    %16 = vector.broadcast %cst_9 : f32 to vector<16x128xf32>
    %17 = arith.minimumf %16, %15 : vector<16x128xf32>
    %18 = vector.broadcast %0 : f32 to vector<16x128xf32>
    %19 = arith.mulf %17, %18 : vector<16x128xf32>
    %c0_10 = arith.constant 0 : index
    %c0_11 = arith.constant 0 : index
    %20 = vector.load %arg4[%c0_10, %c0_11] : memref<128x128xf32, #tpu.memory_space<vmem>>, vector<128x128xf32>
    %cst_12 = arith.constant dense<0.000000e+00> : vector<16x128xf32>
    %21 = tpu.matmul %19, %20, %cst_12 {dimension_numbers = #tpu.dot_dimension_numbers<[1], [0], [0], [1], [0, 0, 1, 1], [], []>} : vector<16x128xf32>, vector<128x128xf32>, vector<16x128xf32> -> vector<16x128xf32>
    %c0_13 = arith.constant 0 : index
    %c0_14 = arith.constant 0 : index
    %22 = vector.load %arg5[%c0_13, %c0_14] : memref<1x128xf32, #tpu.memory_space<vmem>>, vector<1x128xf32>
    %23 = vector.broadcast %22 : vector<1x128xf32> to vector<16x128xf32>
    %24 = arith.addf %21, %23 : vector<16x128xf32>
    %cst_15 = arith.constant 1.000000e+00 : f32
    %25 = arith.divf %cst_15, %1 : f32
    %cst_16 = arith.constant 0.000000e+00 : f32
    %26 = vector.broadcast %cst_16 : f32 to vector<16x128xf32>
    %27 = arith.maximumf %24, %26 : vector<16x128xf32>
    %28 = vector.broadcast %25 : f32 to vector<16x128xf32>
    %29 = arith.mulf %27, %28 : vector<16x128xf32>
    %30 = math.roundeven %29 : vector<16x128xf32>
    %cst_17 = arith.constant 0.000000e+00 : f32
    %cst_18 = arith.constant 2.550000e+02 : f32
    %31 = vector.broadcast %cst_17 : f32 to vector<16x128xf32>
    %32 = arith.maximumf %31, %30 : vector<16x128xf32>
    %33 = vector.broadcast %cst_18 : f32 to vector<16x128xf32>
    %34 = arith.minimumf %33, %32 : vector<16x128xf32>
    %35 = vector.broadcast %1 : f32 to vector<16x128xf32>
    %36 = arith.mulf %34, %35 : vector<16x128xf32>
    %c0_19 = arith.constant 0 : index
    %c0_20 = arith.constant 0 : index
    %37 = vector.load %arg6[%c0_19, %c0_20] : memref<128x128xf32, #tpu.memory_space<vmem>>, vector<128x128xf32>
    %cst_21 = arith.constant dense<0.000000e+00> : vector<16x128xf32>
    %38 = tpu.matmul %36, %37, %cst_21 {dimension_numbers = #tpu.dot_dimension_numbers<[1], [0], [0], [1], [0, 0, 1, 1], [], []>} : vector<16x128xf32>, vector<128x128xf32>, vector<16x128xf32> -> vector<16x128xf32>
    %c0_22 = arith.constant 0 : index
    %c0_23 = arith.constant 0 : index
    %39 = vector.load %arg7[%c0_22, %c0_23] : memref<1x128xf32, #tpu.memory_space<vmem>>, vector<1x128xf32>
    %40 = vector.broadcast %39 : vector<1x128xf32> to vector<16x128xf32>
    %41 = arith.addf %38, %40 : vector<16x128xf32>
    %c0_24 = arith.constant 0 : index
    %c0_25 = arith.constant 0 : index
    %42 = vector.load %arg9[%c0_24, %c0_25] : memref<16x128xf32, #tpu.memory_space<vmem>>, vector<16x128xf32>
    tpu.vector_store %arg9[%c0_24, %c0_25], %41 {strides = array<i32>} : memref<16x128xf32, #tpu.memory_space<vmem>>, vector<16x128xf32>,
    return
  }
  func.func @transform_0(%arg0: i32) -> (i32, i32) {
    %c0_i32 = arith.constant 0 : i32
    %c0_i32_0 = arith.constant 0 : i32
    return %arg0, %c0_i32 : i32, i32
  }
  func.func @transform_1(%arg0: i32) -> (i32, i32) {
    %c0_i32 = arith.constant 0 : i32
    %c0_i32_0 = arith.constant 0 : i32
    %c0_i32_1 = arith.constant 0 : i32
    return %c0_i32, %c0_i32_0 : i32, i32
  }
  func.func @transform_2(%arg0: i32) -> (i32, i32) {
    %c0_i32 = arith.constant 0 : i32
    %c0_i32_0 = arith.constant 0 : i32
    %c0_i32_1 = arith.constant 0 : i32
    return %c0_i32, %c0_i32_0 : i32, i32
  }
  func.func @transform_3(%arg0: i32) -> (i32, i32) {
    %c0_i32 = arith.constant 0 : i32
    %c0_i32_0 = arith.constant 0 : i32
    %c0_i32_1 = arith.constant 0 : i32
    return %c0_i32, %c0_i32_0 : i32, i32
  }
  func.func @transform_4(%arg0: i32) -> (i32, i32) {
    %c0_i32 = arith.constant 0 : i32
    %c0_i32_0 = arith.constant 0 : i32
    %c0_i32_1 = arith.constant 0 : i32
    return %c0_i32, %c0_i32_0 : i32, i32
  }
  func.func @transform_5(%arg0: i32) -> (i32, i32) {
    %c0_i32 = arith.constant 0 : i32
    %c0_i32_0 = arith.constant 0 : i32
    %c0_i32_1 = arith.constant 0 : i32
    return %c0_i32, %c0_i32_0 : i32, i32
  }
  func.func @transform_6(%arg0: i32) -> (i32, i32) {
    %c0_i32 = arith.constant 0 : i32
    %c0_i32_0 = arith.constant 0 : i32
    %c0_i32_1 = arith.constant 0 : i32
    return %c0_i32, %c0_i32_0 : i32, i32
  }
  func.func @transform_7(%arg0: i32) -> i32 {
    %c0_i32 = arith.constant 0 : i32
    %c0_i32_0 = arith.constant 0 : i32
    return %c0_i32 : i32
  }
  func.func @transform_8(%arg0: i32) -> (i32, i32) {
    %c0_i32 = arith.constant 0 : i32
    %c0_i32_0 = arith.constant 0 : i32
    return %arg0, %c0_i32 : i32, i32
  }
}

</mosaic_0001>

<llo_original>
// kernel: tpu_custom_call.1
$region0: #{tpu_custom_call.1}
  #allocation0 [shape = 'u32[]', space=smem, size = 0x4, offset = 0x4, fixed_abs, tag = 'smem constant byte address 0x4 - core index']
  #allocation1 [shape = 'u32[144,128]{1,0:T(1,128)}', space=vmem, size = 0x12000, scoped, tag = 'internal scratch']
  %s0 = inlined_call_operand.hbm [shape: f32[16,128], index: 0, kind: input, shape index: {}]
  %s1 = inlined_call_operand.hbm [shape: f32[128,128], index: 1, kind: input, shape index: {}]
  %s2 = inlined_call_operand.vmem [shape: f32[1,128], index: 2, kind: input, shape index: {}]
  %s3 = inlined_call_operand.hbm [shape: f32[128,128], index: 3, kind: input, shape index: {}]
  %s4 = inlined_call_operand.vmem [shape: f32[1,128], index: 4, kind: input, shape index: {}]
  %s5 = inlined_call_operand.hbm [shape: f32[128,128], index: 5, kind: input, shape index: {}]
  %s6 = inlined_call_operand.vmem [shape: f32[1,128], index: 6, kind: input, shape index: {}]
  %s7 = inlined_call_operand.vmem [shape: f32[2], index: 7, kind: input, shape index: {}]
  %s8 = inlined_call_operand.hbm [shape: f32[16,128], index: 8, kind: output, shape index: {}]
  %s9 = sld [smem:[#allocation0]]
  $region62: #{tpu_custom_call.1} parent=0
    _
  %s11 = ssub.s32 1, %s9
  %s12 = scalar_select 0, %s11, %s9
  $region1: #{tpu_custom_call.1} parent=0
    #allocation2 [shape = 'u8[8192]{0}', space=vmem, size = 0x2000, scoped, tag = 'input window, operand 0, single buffered']
    #allocation3 [shape = 's32[1]{0}', space=sflag, size = 0x4, scoped, tag = 'scoped memory for tpu_custom_call.1']
    #allocation4 [shape = 's32[1]{0}', space=sflag, size = 0x4, scoped, tag = 'scoped memory for tpu_custom_call.1']
    #allocation5 [shape = 's32[1]{0}', space=sflag, size = 0x4, scoped, tag = 'scoped memory for tpu_custom_call.1']
    #allocation6 [shape = 'u8[65536]{0}', space=vmem, size = 0x10000, scoped, tag = 'input window, operand 1, single buffered']
    #allocation7 [shape = 's32[1]{0}', space=sflag, size = 0x4, scoped, tag = 'scoped memory for tpu_custom_call.1']
    #allocation8 [shape = 'u8[65536]{0}', space=vmem, size = 0x10000, scoped, tag = 'input window, operand 3, single buffered']
    #allocation9 [shape = 'u8[65536]{0}', space=vmem, size = 0x10000, scoped, tag = 'input window, operand 5, single buffered']
    #allocation10 [shape = 's32[1]{0}', space=sflag, size = 0x4, scoped, tag = 'scoped memory for tpu_custom_call.1']
    #allocation11 [shape = 'u8[512]{0}', space=smem, size = 0x200, scoped, tag = 'input window, operand 7, single buffered']
    #allocation12 [shape = 'u8[8192]{0}', space=vmem, size = 0x2000, scoped, tag = 'output window, operand 0, single buffered']
    %13 = vsyncpa [#allocation3], 0
    %14 = vsyncpa [#allocation7], 0
    %15 = vsyncpa [#allocation10], 0
    %16 = vsyncpa [#allocation5], 0
    %17 = vsyncpa [#allocation4], 0
    // Predicated region
    $region2: #{tpu_custom_call.1} parent=1 // pred_check
      _
    $region3: #{tpu_custom_call.1} parent=1 // pred_check_branch
      %19 = sbr.rel (0) target = $region5
    $region4: #{tpu_custom_call.1} parent=1 // pred_region
      %s21 = ssub.s32 256, 256
      %22 = vsyncadd [#allocation3], %s21
      %s23 = sshll.u32 [#allocation2], 4
      %s24 = int_to_ptr.vmem [resolvable:$true] %s23
      %29 = dma.hbm_to_vmem [thread:$0]  %s0, 256, %s24, [#allocation3], 128, 128, 8
    $region5: #{tpu_custom_call.1} parent=1 // pred_fallthru
      _
    // Predicated region
    $region6: #{tpu_custom_call.1} parent=1 // pred_check
      _
    $region7: #{tpu_custom_call.1} parent=1 // pred_check_branch
      %31 = sbr.rel (0) target = $region9
    $region8: #{tpu_custom_call.1} parent=1 // pred_region
      %s33 = ssub.s32 2048, 2048
      %34 = vsyncadd [#allocation7], %s33
      %s35 = sshll.u32 [#allocation6], 4
      %s36 = int_to_ptr.vmem [resolvable:$true] %s35
      %41 = dma.hbm_to_vmem [thread:$0]  %s1, 2048, %s36, [#allocation7], 128, 128, 8
    $region9: #{tpu_custom_call.1} parent=1 // pred_fallthru
      _
    // Predicated region
    $region10: #{tpu_custom_call.1} parent=1 // pred_check
      _
    $region11: #{tpu_custom_call.1} parent=1 // pred_check_branch
      %43 = sbr.rel (0) target = $region13
    $region12: #{tpu_custom_call.1} parent=1 // pred_region
      _
    $region13: #{tpu_custom_call.1} parent=1 // pred_fallthru
      _
    // Predicated region
    $region14: #{tpu_custom_call.1} parent=1 // pred_check
      _
    $region15: #{tpu_custom_call.1} parent=1 // pred_check_branch
      %45 = sbr.rel (0) target = $region17
    $region16: #{tpu_custom_call.1} parent=1 // pred_region
      %s47 = ssub.s32 2048, 2048
      %48 = vsyncadd [#allocation7], %s47
      %s49 = sshll.u32 [#allocation8], 4
      %s50 = int_to_ptr.vmem [resolvable:$true] %s49
      %55 = dma.hbm_to_vmem [thread:$0]  %s3, 2048, %s50, [#allocation7], 128, 128, 8
    $region17: #{tpu_custom_call.1} parent=1 // pred_fallthru
      _
    // Predicated region
    $region18: #{tpu_custom_call.1} parent=1 // pred_check
      _
    $region19: #{tpu_custom_call.1} parent=1 // pred_check_branch
      %57 = sbr.rel (0) target = $region21
    $region20: #{tpu_custom_call.1} parent=1 // pred_region
      _
    $region21: #{tpu_custom_call.1} parent=1 // pred_fallthru
      _
    // Predicated region
    $region22: #{tpu_custom_call.1} parent=1 // pred_check
      _
    $region23: #{tpu_custom_call.1} parent=1 // pred_check_branch
      %59 = sbr.rel (0) target = $region25
    $region24: #{tpu_custom_call.1} parent=1 // pred_region
      %s61 = ssub.s32 2048, 2048
      %62 = vsyncadd [#allocation10], %s61
      %s63 = sshll.u32 [#allocation9], 4
      %s64 = int_to_ptr.vmem [resolvable:$true] %s63
      %69 = dma.hbm_to_vmem [thread:$0]  %s5, 2048, %s64, [#allocation10], 128, 128, 8
    $region25: #{tpu_custom_call.1} parent=1 // pred_fallthru
      _
    // Predicated region
    $region26: #{tpu_custom_call.1} parent=1 // pred_check
      _
    $region27: #{tpu_custom_call.1} parent=1 // pred_check_branch
      %71 = sbr.rel (0) target = $region29
    $region28: #{tpu_custom_call.1} parent=1 // pred_region
      _
    $region29: #{tpu_custom_call.1} parent=1 // pred_fallthru
      _
    // Predicated region
    $region30: #{tpu_custom_call.1} parent=1 // pred_check
      _
    $region31: #{tpu_custom_call.1} parent=1 // pred_check_branch
      %73 = sbr.rel (0) target = $region33
    $region32: #{tpu_custom_call.1} parent=1 // pred_region
      %s75 = ssub.s32 16, 16
      %76 = vsyncadd [#allocation5], %s75
      %s78 = sshll.u32 %s7, 4
      %s79 = int_to_ptr.vmem [resolvable:$true] %s78
      %81 = dma.vmem_to_smem %s79, 16, [#allocation11], [#allocation5]
    $region33: #{tpu_custom_call.1} parent=1 // pred_fallthru
      _
    // Predicated region
    $region34: #{tpu_custom_call.1} parent=1 // pred_check
      _
    $region35: #{tpu_custom_call.1} parent=1 // pred_check_branch
      %83 = sbr.rel (0) target = $region37
    $region36: #{tpu_custom_call.1} parent=1 // pred_region
      %84 = dma.done [#allocation3], 256
    $region37: #{tpu_custom_call.1} parent=1 // pred_fallthru
      _
    // Predicated region
    $region38: #{tpu_custom_call.1} parent=1 // pred_check
      _
    $region39: #{tpu_custom_call.1} parent=1 // pred_check_branch
      %86 = sbr.rel (0) target = $region41
    $region40: #{tpu_custom_call.1} parent=1 // pred_region
      %87 = dma.done [#allocation7], 2048
    $region41: #{tpu_custom_call.1} parent=1 // pred_fallthru
      _
    // Predicated region
    $region42: #{tpu_custom_call.1} parent=1 // pred_check
      _
    $region43: #{tpu_custom_call.1} parent=1 // pred_check_branch
      %89 = sbr.rel (0) target = $region45
    $region44: #{tpu_custom_call.1} parent=1 // pred_region
      %90 = dma.done [#allocation7], 2048
    $region45: #{tpu_custom_call.1} parent=1 // pred_fallthru
      _
    // Predicated region
    $region46: #{tpu_custom_call.1} parent=1 // pred_check
      _
    $region47: #{tpu_custom_call.1} parent=1 // pred_check_branch
      %92 = sbr.rel (0) target = $region49
    $region48: #{tpu_custom_call.1} parent=1 // pred_region
      %93 = dma.done [#allocation10], 2048
    $region49: #{tpu_custom_call.1} parent=1 // pred_fallthru
      _
    // Predicated region
    $region50: #{tpu_custom_call.1} parent=1 // pred_check
      _
    $region51: #{tpu_custom_call.1} parent=1 // pred_check_branch
      %95 = sbr.rel (0) target = $region53
    $region52: #{tpu_custom_call.1} parent=1 // pred_region
      %96 = dma.done [#allocation5], 16
    $region53: #{tpu_custom_call.1} parent=1 // pred_fallthru
      _
    %97 = sfence
    %s98 = sld [smem:[#allocation11]]
    %s99 = sld [smem:[#allocation11 + $0x1]]
    %v100 = vld [vmem:[#allocation2] sm:$0xff]
    %v101 = vld [vmem:[#allocation2 + $0x8] sm:$0xff]
    %v102 = vld [vmem:[#allocation6] sm:$0xff]
    %v103 = vld [vmem:[#allocation6 + $0x8] sm:$0xff]
    %v104 = vld [vmem:[#allocation6 + $0x10] sm:$0xff]
    %v105 = vld [vmem:[#allocation6 + $0x18] sm:$0xff]
    %v106 = vld [vmem:[#allocation6 + $0x20] sm:$0xff]
    %v107 = vld [vmem:[#allocation6 + $0x28] sm:$0xff]
    %v108 = vld [vmem:[#allocation6 + $0x30] sm:$0xff]
    %v109 = vld [vmem:[#allocation6 + $0x38] sm:$0xff]
    %v110 = vld [vmem:[#allocation6 + $0x40] sm:$0xff]
    %v111 = vld [vmem:[#allocation6 + $0x48] sm:$0xff]
    %v112 = vld [vmem:[#allocation6 + $0x50] sm:$0xff]
    %v113 = vld [vmem:[#allocation6 + $0x58] sm:$0xff]
    %v114 = vld [vmem:[#allocation6 + $0x60] sm:$0xff]
    %v115 = vld [vmem:[#allocation6 + $0x68] sm:$0xff]
    %v116 = vld [vmem:[#allocation6 + $0x70] sm:$0xff]
    %v117 = vld [vmem:[#allocation6 + $0x78] sm:$0xff]
    %v118 = vld [vmem:[%s2] sm:$0x1]
    %v120 = vlaneseq
    %v121 = vshrl.u32 %v120, 7
    %v122 = vsub.s32 0, %v121
    %v123 = vrot.slane %v118, %v122
    %125 = vmatprep.subr.mxu0 0.0
    %126 = vmatpush1.msra.mxu0 %v102
    %127 = vmatprep.subr.mxu0 0.0
    %128 = vmatpush1.msra.mxu0 %v103
    %129 = vmatprep.subr.mxu0 0.0
    %130 = vmatpush1.msra.mxu0 %v104
    %131 = vmatprep.subr.mxu0 0.0
    %132 = vmatpush1.msra.mxu0 %v105
    %133 = vmatprep.subr.mxu0 0.0
    %134 = vmatpush1.msra.mxu0 %v106
    %135 = vmatprep.subr.mxu0 0.0
    %136 = vmatpush1.msra.mxu0 %v107
    %137 = vmatprep.subr.mxu0 0.0
    %138 = vmatpush1.msra.mxu0 %v108
    %139 = vmatprep.subr.mxu0 0.0
    %140 = vmatpush1.msra.mxu0 %v109
    %141 = vmatprep.subr.mxu0 0.0
    %142 = vmatpush1.msra.mxu0 %v110
    %143 = vmatprep.subr.mxu0 0.0
    %144 = vmatpush1.msra.mxu0 %v111
    %145 = vmatprep.subr.mxu0 0.0
    %146 = vmatpush1.msra.mxu0 %v112
    %147 = vmatprep.subr.mxu0 0.0
    %148 = vmatpush1.msra.mxu0 %v113
    %149 = vmatprep.subr.mxu0 0.0
    %150 = vmatpush1.msra.mxu0 %v114
    %151 = vmatprep.subr.mxu0 0.0
    %152 = vmatpush1.msra.mxu0 %v115
    %153 = vmatprep.subr.mxu0 0.0
    %154 = vmatpush1.msra.mxu0 %v116
    %155 = vmatprep.subr.mxu0 0.0
    %156 = vmatpush1.msra.mxu0 %v117
    %157 = vmatprep.subr.mxu0 0.0
    %158 = vmatpush1.msra.mxu0 0.0
    %159 = vmatprep.subr.mxu0 0.0
    %160 = vmatpush1.msra.mxu0 0.0
    %161 = vmatprep.subr.mxu0 0.0
    %162 = vmatpush1.msra.mxu0 0.0
    %163 = vmatprep.subr.mxu0 0.0
    %164 = vmatpush1.msra.mxu0 0.0
    %165 = vmatprep.subr.mxu0 0.0
    %166 = vmatpush1.msra.mxu0 0.0
    %167 = vmatprep.subr.mxu0 0.0
    %168 = vmatpush1.msra.mxu0 0.0
    %169 = vmatprep.subr.mxu0 0.0
    %170 = vmatpush1.msra.mxu0 0.0
    %171 = vmatprep.subr.mxu0 0.0
    %172 = vmatpush1.msra.mxu0 0.0
    %173 = vmatprep.subr.mxu0 0.0
    %174 = vmatpush1.msra.mxu0 0.0
    %175 = vmatprep.subr.mxu0 0.0
    %176 = vmatpush1.msra.mxu0 0.0
    %177 = vmatprep.subr.mxu0 0.0
    %178 = vmatpush1.msra.mxu0 0.0
    %179 = vmatprep.subr.mxu0 0.0
    %180 = vmatpush1.msra.mxu0 0.0
    %181 = vmatprep.subr.mxu0 0.0
    %182 = vmatpush1.msra.mxu0 0.0
    %183 = vmatprep.subr.mxu0 0.0
    %184 = vmatpush1.msra.mxu0 0.0
    %185 = vmatprep.subr.mxu0 0.0
    %186 = vmatpush1.msra.mxu0 0.0
    %187 = vmatprep.subr.mxu0 0.0
    %188 = vmatpush1.msra.mxu0 0.0
    %189 = vmatprep.mubr.f32.mxu0 0.0
    %190 = vmatmul.mubr.f32.gmra.mrb[0].mxu0 %v100
    %v191 = vpop.f32.mrb[0].mxu0
    %v192 = vadd.f32 %v123, %v191
    %v193 = vpop.f32.mrb[0].mxu0
    %194 = vmatprep.mubr.f32.mxu0 0.0
    %195 = vmatmul.mubr.f32.gmra.mrb[0].mxu0 %v101
    %v196 = vpop.f32.mrb[0].mxu0
    %v197 = vadd.f32 %v123, %v196
    %v198 = vpop.f32.mrb[0].mxu0
    %199 = vdwg.mxu0
    %v200 = vstv %s98
    %v201 = vrcp.pop %v200
    %s202 = vtos %v201
    %v203 = vmax.f32 %v192, 0.0
    %v204 = vmax.f32 %v197, 0.0
    %v205 = vstv %s202
    %v206 = vmul.f32 %v203, %v205
    %v207 = vmul.f32 %v204, %v205
    %v208 = vround.ne.pseudo %v206
    %v209 = vround.ne.pseudo %v207
    %v210 = vmax.f32 %v208, 0.0
    %v211 = vmax.f32 %v209, 0.0
    %v212 = vmin.f32 %v210, 255.0
    %v213 = vmin.f32 %v211, 255.0
    %v214 = vstv %s98
    %v215 = vmul.f32 %v212, %v214
    %v216 = vmul.f32 %v213, %v214
    %v217 = vld [vmem:[#allocation8] sm:$0xff]
    %v218 = vld [vmem:[#allocation8 + $0x8] sm:$0xff]
    %v219 = vld [vmem:[#allocation8 + $0x10] sm:$0xff]
    %v220 = vld [vmem:[#allocation8 + $0x18] sm:$0xff]
    %v221 = vld [vmem:[#allocation8 + $0x20] sm:$0xff]
    %v222 = vld [vmem:[#allocation8 + $0x28] sm:$0xff]
    %v223 = vld [vmem:[#allocation8 + $0x30] sm:$0xff]
    %v224 = vld [vmem:[#allocation8 + $0x38] sm:$0xff]
    %v225 = vld [vmem:[#allocation8 + $0x40] sm:$0xff]
    %v226 = vld [vmem:[#allocation8 + $0x48] sm:$0xff]
    %v227 = vld [vmem:[#allocation8 + $0x50] sm:$0xff]
    %v228 = vld [vmem:[#allocation8 + $0x58] sm:$0xff]
    %v229 = vld [vmem:[#allocation8 + $0x60] sm:$0xff]
    %v230 = vld [vmem:[#allocation8 + $0x68] sm:$0xff]
    %v231 = vld [vmem:[#allocation8 + $0x70] sm:$0xff]
    %v232 = vld [vmem:[#allocation8 + $0x78] sm:$0xff]
    %v233 = vld [vmem:[%s4] sm:$0x1]
    %v235 = vlaneseq
    %v236 = vshrl.u32 %v235, 7
    %v237 = vsub.s32 0, %v236
    %v238 = vrot.slane %v233, %v237
    %240 = vmatprep.subr.mxu0 0.0
    %241 = vmatpush1.msra.mxu0 %v217
    %242 = vmatprep.subr.mxu0 0.0
    %243 = vmatpush1.msra.mxu0 %v218
    %244 = vmatprep.subr.mxu0 0.0
    %245 = vmatpush1.msra.mxu0 %v219
    %246 = vmatprep.subr.mxu0 0.0
    %247 = vmatpush1.msra.mxu0 %v220
    %248 = vmatprep.subr.mxu0 0.0
    %249 = vmatpush1.msra.mxu0 %v221
    %250 = vmatprep.subr.mxu0 0.0
    %251 = vmatpush1.msra.mxu0 %v222
    %252 = vmatprep.subr.mxu0 0.0
    %253 = vmatpush1.msra.mxu0 %v223
    %254 = vmatprep.subr.mxu0 0.0
    %255 = vmatpush1.msra.mxu0 %v224
    %256 = vmatprep.subr.mxu0 0.0
    %257 = vmatpush1.msra.mxu0 %v225
    %258 = vmatprep.subr.mxu0 0.0
    %259 = vmatpush1.msra.mxu0 %v226
    %260 = vmatprep.subr.mxu0 0.0
    %261 = vmatpush1.msra.mxu0 %v227
    %262 = vmatprep.subr.mxu0 0.0
    %263 = vmatpush1.msra.mxu0 %v228
    %264 = vmatprep.subr.mxu0 0.0
    %265 = vmatpush1.msra.mxu0 %v229
    %266 = vmatprep.subr.mxu0 0.0
    %267 = vmatpush1.msra.mxu0 %v230
    %268 = vmatprep.subr.mxu0 0.0
    %269 = vmatpush1.msra.mxu0 %v231
    %270 = vmatprep.subr.mxu0 0.0
    %271 = vmatpush1.msra.mxu0 %v232
    %272 = vmatprep.subr.mxu0 0.0
    %273 = vmatpush1.msra.mxu0 0.0
    %274 = vmatprep.subr.mxu0 0.0
    %275 = vmatpush1.msra.mxu0 0.0
    %276 = vmatprep.subr.mxu0 0.0
    %277 = vmatpush1.msra.mxu0 0.0
    %278 = vmatprep.subr.mxu0 0.0
    %279 = vmatpush1.msra.mxu0 0.0
    %280 = vmatprep.subr.mxu0 0.0
    %281 = vmatpush1.msra.mxu0 0.0
    %282 = vmatprep.subr.mxu0 0.0
    %283 = vmatpush1.msra.mxu0 0.0
    %284 = vmatprep.subr.mxu0 0.0
    %285 = vmatpush1.msra.mxu0 0.0
    %286 = vmatprep.subr.mxu0 0.0
    %287 = vmatpush1.msra.mxu0 0.0
    %288 = vmatprep.subr.mxu0 0.0
    %289 = vmatpush1.msra.mxu0 0.0
    %290 = vmatprep.subr.mxu0 0.0
    %291 = vmatpush1.msra.mxu0 0.0
    %292 = vmatprep.subr.mxu0 0.0
    %293 = vmatpush1.msra.mxu0 0.0
    %294 = vmatprep.subr.mxu0 0.0
    %295 = vmatpush1.msra.mxu0 0.0
    %296 = vmatprep.subr.mxu0 0.0
    %297 = vmatpush1.msra.mxu0 0.0
    %298 = vmatprep.subr.mxu0 0.0
    %299 = vmatpush1.msra.mxu0 0.0
    %300 = vmatprep.subr.mxu0 0.0
    %301 = vmatpush1.msra.mxu0 0.0
    %302 = vmatprep.subr.mxu0 0.0
    %303 = vmatpush1.msra.mxu0 0.0
    %304 = vmatprep.mubr.f32.mxu0 0.0
    %305 = vmatmul.mubr.f32.gmra.mrb[0].mxu0 %v215
    %v306 = vpop.f32.mrb[0].mxu0
    %v307 = vadd.f32 %v238, %v306
    %v308 = vpop.f32.mrb[0].mxu0
    %309 = vmatprep.mubr.f32.mxu0 0.0
    %310 = vmatmul.mubr.f32.gmra.mrb[0].mxu0 %v216
    %v311 = vpop.f32.mrb[0].mxu0
    %v312 = vadd.f32 %v238, %v311
    %v313 = vpop.f32.mrb[0].mxu0
    %314 = vdwg.mxu0
    %v315 = vstv %s99
    %v316 = vrcp.pop %v315
    %s317 = vtos %v316
    %v318 = vmax.f32 %v307, 0.0
    %v319 = vmax.f32 %v312, 0.0
    %v320 = vstv %s317
    %v321 = vmul.f32 %v318, %v320
    %v322 = vmul.f32 %v319, %v320
    %v323 = vround.ne.pseudo %v321
    %v324 = vround.ne.pseudo %v322
    %v325 = vmax.f32 %v323, 0.0
    %v326 = vmax.f32 %v324, 0.0
    %v327 = vmin.f32 %v325, 255.0
    %v328 = vmin.f32 %v326, 255.0
    %v329 = vstv %s99
    %v330 = vmul.f32 %v327, %v329
    %v331 = vmul.f32 %v328, %v329
    %v332 = vld [vmem:[#allocation9] sm:$0xff]
    %v333 = vld [vmem:[#allocation9 + $0x8] sm:$0xff]
    %v334 = vld [vmem:[#allocation9 + $0x10] sm:$0xff]
    %v335 = vld [vmem:[#allocation9 + $0x18] sm:$0xff]
    %v336 = vld [vmem:[#allocation9 + $0x20] sm:$0xff]
    %v337 = vld [vmem:[#allocation9 + $0x28] sm:$0xff]
    %v338 = vld [vmem:[#allocation9 + $0x30] sm:$0xff]
    %v339 = vld [vmem:[#allocation9 + $0x38] sm:$0xff]
    %v340 = vld [vmem:[#allocation9 + $0x40] sm:$0xff]
    %v341 = vld [vmem:[#allocation9 + $0x48] sm:$0xff]
    %v342 = vld [vmem:[#allocation9 + $0x50] sm:$0xff]
    %v343 = vld [vmem:[#allocation9 + $0x58] sm:$0xff]
    %v344 = vld [vmem:[#allocation9 + $0x60] sm:$0xff]
    %v345 = vld [vmem:[#allocation9 + $0x68] sm:$0xff]
    %v346 = vld [vmem:[#allocation9 + $0x70] sm:$0xff]
    %v347 = vld [vmem:[#allocation9 + $0x78] sm:$0xff]
    %v348 = vld [vmem:[%s6] sm:$0x1]
    %v350 = vlaneseq
    %v351 = vshrl.u32 %v350, 7
    %v352 = vsub.s32 0, %v351
    %v353 = vrot.slane %v348, %v352
    %355 = vmatprep.subr.mxu0 0.0
    %356 = vmatpush1.msra.mxu0 %v332
    %357 = vmatprep.subr.mxu0 0.0
    %358 = vmatpush1.msra.mxu0 %v333
    %359 = vmatprep.subr.mxu0 0.0
    %360 = vmatpush1.msra.mxu0 %v334
    %361 = vmatprep.subr.mxu0 0.0
    %362 = vmatpush1.msra.mxu0 %v335
    %363 = vmatprep.subr.mxu0 0.0
    %364 = vmatpush1.msra.mxu0 %v336
    %365 = vmatprep.subr.mxu0 0.0
    %366 = vmatpush1.msra.mxu0 %v337
    %367 = vmatprep.subr.mxu0 0.0
    %368 = vmatpush1.msra.mxu0 %v338
    %369 = vmatprep.subr.mxu0 0.0
    %370 = vmatpush1.msra.mxu0 %v339
    %371 = vmatprep.subr.mxu0 0.0
    %372 = vmatpush1.msra.mxu0 %v340
    %373 = vmatprep.subr.mxu0 0.0
    %374 = vmatpush1.msra.mxu0 %v341
    %375 = vmatprep.subr.mxu0 0.0
    %376 = vmatpush1.msra.mxu0 %v342
    %377 = vmatprep.subr.mxu0 0.0
    %378 = vmatpush1.msra.mxu0 %v343
    %379 = vmatprep.subr.mxu0 0.0
    %380 = vmatpush1.msra.mxu0 %v344
    %381 = vmatprep.subr.mxu0 0.0
    %382 = vmatpush1.msra.mxu0 %v345
    %383 = vmatprep.subr.mxu0 0.0
    %384 = vmatpush1.msra.mxu0 %v346
    %385 = vmatprep.subr.mxu0 0.0
    %386 = vmatpush1.msra.mxu0 %v347
    %387 = vmatprep.subr.mxu0 0.0
    %388 = vmatpush1.msra.mxu0 0.0
    %389 = vmatprep.subr.mxu0 0.0
    %390 = vmatpush1.msra.mxu0 0.0
    %391 = vmatprep.subr.mxu0 0.0
    %392 = vmatpush1.msra.mxu0 0.0
    %393 = vmatprep.subr.mxu0 0.0
    %394 = vmatpush1.msra.mxu0 0.0
    %395 = vmatprep.subr.mxu0 0.0
    %396 = vmatpush1.msra.mxu0 0.0
    %397 = vmatprep.subr.mxu0 0.0
    %398 = vmatpush1.msra.mxu0 0.0
    %399 = vmatprep.subr.mxu0 0.0
    %400 = vmatpush1.msra.mxu0 0.0
    %401 = vmatprep.subr.mxu0 0.0
    %402 = vmatpush1.msra.mxu0 0.0
    %403 = vmatprep.subr.mxu0 0.0
    %404 = vmatpush1.msra.mxu0 0.0
    %405 = vmatprep.subr.mxu0 0.0
    %406 = vmatpush1.msra.mxu0 0.0
    %407 = vmatprep.subr.mxu0 0.0
    %408 = vmatpush1.msra.mxu0 0.0
    %409 = vmatprep.subr.mxu0 0.0
    %410 = vmatpush1.msra.mxu0 0.0
    %411 = vmatprep.subr.mxu0 0.0
    %412 = vmatpush1.msra.mxu0 0.0
    %413 = vmatprep.subr.mxu0 0.0
    %414 = vmatpush1.msra.mxu0 0.0
    %415 = vmatprep.subr.mxu0 0.0
    %416 = vmatpush1.msra.mxu0 0.0
    %417 = vmatprep.subr.mxu0 0.0
    %418 = vmatpush1.msra.mxu0 0.0
    %419 = vmatprep.mubr.f32.mxu0 0.0
    %420 = vmatmul.mubr.f32.gmra.mrb[0].mxu0 %v330
    %v421 = vpop.f32.mrb[0].mxu0
    %v422 = vadd.f32 %v353, %v421
    %v423 = vpop.f32.mrb[0].mxu0
    %424 = vmatprep.mubr.f32.mxu0 0.0
    %425 = vmatmul.mubr.f32.gmra.mrb[0].mxu0 %v331
    %v426 = vpop.f32.mrb[0].mxu0
    %v427 = vadd.f32 %v353, %v426
    %v428 = vpop.f32.mrb[0].mxu0
    %429 = vdwg.mxu0
    %430 = vst [vmem:[#allocation12] sm:$0xff] %v422
    %431 = vst [vmem:[#allocation12 + $0x8] sm:$0xff] %v427
    // Predicated region
    $region54: #{tpu_custom_call.1} parent=1 // pred_check
      _
    $region55: #{tpu_custom_call.1} parent=1 // pred_check_branch
      %433 = sbr.rel (0) target = $region57
    $region56: #{tpu_custom_call.1} parent=1 // pred_region
      %s435 = ssub.s32 256, 256
      %436 = vsyncadd [#allocation4], %s435
      %s437 = sshll.u32 [#allocation12], 4
      %s438 = int_to_ptr.vmem [resolvable:$true] %s437
      %443 = dma.vmem_to_hbm [thread:$0]  %s438, 256, %s8, [#allocation4], 128, 128, 8
    $region57: #{tpu_custom_call.1} parent=1 // pred_fallthru
      _
    // Predicated region
    $region58: #{tpu_custom_call.1} parent=1 // pred_check
      _
    $region59: #{tpu_custom_call.1} parent=1 // pred_check_branch
      %445 = sbr.rel (0) target = $region61
    $region60: #{tpu_custom_call.1} parent=1 // pred_region
      %446 = dma.done [#allocation4], 256
    $region61: #{tpu_custom_call.1} parent=1 // pred_fallthru
      _
    %447 = vsyncpa [#allocation3], 1
    %448 = vsyncpa [#allocation7], 1
    %449 = vsyncpa [#allocation10], 1
    %450 = vsyncpa [#allocation4], 1
    %451 = vsyncpa [#allocation5], 1

</llo_original>
